<compile_context>
chip_gen: v6e
topology: v6e:2x2x1
jax: 0.10.0
libtpu: 0.0.40
codegen_flags: <defaults>
</compile_context>

<pallas_src>
import jax
import jax.numpy as jnp
from jax.experimental import pallas as pl
from jax.experimental.pallas import tpu as pltpu


def _round_up(n, m):
    return ((n + m - 1) // m) * m


def _vanet_kernel(x_ref, w1_ref, b1_ref, w2_ref, o_ref):
    # fc1 + ReLU. Bias added as a broadcast row (cheap VPU work); hidden
    # column `hidden_dim` becomes exactly 1 after ReLU (bias-only column) so
    # the folded head bias rides the second matmul.
    h = jnp.maximum(
        jnp.dot(x_ref[...], w1_ref[...], preferred_element_type=jnp.float32)
        + b1_ref[...],
        0.0,
    )  # (tb, hid_p)

    # Fused (advantage|value|dueling-combine) head: one matmul, direct store.
    # Padded output lanes are exact zeros (their W2' columns are zero).
    o_ref[...] = jnp.dot(
        h, w2_ref[...], preferred_element_type=jnp.float32
    ).astype(o_ref.dtype)


def _prep_params(params, observation_dim, hidden_dim, action_dim):
    """Pad weights and pre-fold the dueling combine. Done once, outside the kernel."""
    hid_p = max(128, _round_up(hidden_dim + 1, 128))  # +1 constant-1 column
    out_p = max(8, _round_up(action_dim, 8))          # narrow, lane-masked store

    w1, b1 = params["w1"], params["b1"]
    wa, ba = params["wa"], params["ba"]
    wv, bv = params["wv"], params["bv"]

    # fc1 weights: (obs, hid_p). Column `hidden_dim` is zero -> after +b1 and
    # ReLU it is exactly 1 (b1_p carries the 1.0 there).
    w1_p = jnp.zeros((observation_dim, hid_p), jnp.float32)
    w1_p = w1_p.at[:, :hidden_dim].set(w1)

    # fc1 bias row: (1, hid_p).
    b1_p = jnp.zeros((1, hid_p), jnp.float32)
    b1_p = b1_p.at[0, :hidden_dim].set(b1.reshape(-1))
    b1_p = b1_p.at[0, hidden_dim].set(1.0)  # constant-1 hidden unit

    # Dueling fold (exact, linear in h):
    #   out[:, i] = h @ (wa[:,i] - mean_j wa[:,j] + wv) + (ba[i] - mean(ba) + bv)
    wa_f = wa - jnp.mean(wa, axis=1, keepdims=True) + wv.reshape(-1, 1)
    ba_f = ba.reshape(-1) - jnp.mean(ba) + bv.reshape(())

    w2_p = jnp.zeros((hid_p, out_p), jnp.float32)
    w2_p = w2_p.at[:hidden_dim, :action_dim].set(wa_f)
    w2_p = w2_p.at[hidden_dim, :action_dim].set(ba_f)  # via constant-1 column
    return w1_p, b1_p, w2_p, hid_p, out_p


def vanet_forward(x, params):
    """x: (B, obs_dim) float32. params: dict of weights/biases (see init_params)."""
    observation_dim, hidden_dim = params["w1"].shape
    action_dim = params["wa"].shape[1]
    B = x.shape[0]

    w1_p, b1_p, w2_p, hid_p, out_p = _prep_params(
        params, observation_dim, hidden_dim, action_dim
    )

    # Batch tiling: large tiles (HBM/step-overhead bound), but sized from
    # cdiv(B, 2) so v7x always has >= 2 parallel grid steps to shard across
    # its two TensorCores. Weights stay VMEM-resident (constant index maps).
    tb = max(8, min(1024, _round_up(pl.cdiv(B, 2), 8)))
    b_pad = _round_up(B, tb)
    nb = b_pad // tb

    # Minimal batch-row padding only when needed (no ones-column rewrite of x).
    x_in = x if b_pad == B else jnp.pad(x, ((0, b_pad - B), (0, 0)))

    out_padded = pl.pallas_call(
        _vanet_kernel,
        out_shape=jax.ShapeDtypeStruct((b_pad, out_p), jnp.float32),
        grid=(nb,),
        in_specs=[
            pl.BlockSpec((tb, observation_dim), lambda i: (i, 0)),
            pl.BlockSpec((observation_dim, hid_p), lambda i: (0, 0)),  # resident
            pl.BlockSpec((1, hid_p), lambda i: (0, 0)),                # resident
            pl.BlockSpec((hid_p, out_p), lambda i: (0, 0)),            # resident
        ],
        out_specs=pl.BlockSpec((tb, out_p), lambda i: (i, 0)),
        compiler_params=pltpu.CompilerParams(
            dimension_semantics=("parallel",)  # shard batch tiles across TCs (v7x)
        ),
    )(x_in, w1_p, b1_p, w2_p)

    return out_padded[:B, :action_dim]


def init_params(key, observation_dim, hidden_dim, action_dim):
    """Deterministic synthetic init (uniform, roughly PyTorch Linear-style scale)."""
    ks = jax.random.split(key, 6)

    def lin(kw, kb, fan_in, fan_out):
        bound = 1.0 / jnp.sqrt(fan_in)
        w = jax.random.uniform(kw, (fan_in, fan_out), jnp.float32, -bound, bound)
        b = jax.random.uniform(kb, (1, fan_out), jnp.float32, -bound, bound)
        return w, b

    w1, b1 = lin(ks[0], ks[1], observation_dim, hidden_dim)
    wa, ba = lin(ks[2], ks[3], hidden_dim, action_dim)
    wv, bv = lin(ks[4], ks[5], hidden_dim, 1)
    return {"w1": w1, "b1": b1, "wa": wa, "ba": ba, "wv": wv, "bv": bv}


def vanet_ref(x, p):
    """Plain-JAX reference mirroring the PyTorch forward exactly."""
    h = jax.nn.relu(x @ p["w1"] + p["b1"])
    a = h @ p["wa"] + p["ba"]
    v = h @ p["wv"] + p["bv"]
    return v + a - jnp.mean(a, axis=1, keepdims=True)


if __name__ == "__main__":
    observation_dim, hidden_dim, action_dim = 4, 32, 6
    batch = 8

    key = jax.random.PRNGKey(0)
    k_params, k_x = jax.random.split(key)
    params = init_params(k_params, observation_dim, hidden_dim, action_dim)
    x = jax.random.normal(k_x, (batch, observation_dim), jnp.float32)

    out = vanet_forward(x, params)
    out = jax.block_until_ready(out)

    ref = vanet_ref(x, params)
    assert out.shape == (batch, action_dim)
    assert jnp.allclose(out, ref, atol=1e-5, rtol=1e-5), "mismatch vs JAX reference"

    print("KERNEL_OK")
</pallas_src>

<mosaic_0001>
module attributes {stable_mosaic.version = 11 : i64} {
  func.func @_vanet_kernel(%arg0: i32, %arg1: memref<8x4xf32, #tpu.memory_space<vmem>>, %arg2: memref<4x128xf32, #tpu.memory_space<vmem>>, %arg3: memref<1x128xf32, #tpu.memory_space<vmem>>, %arg4: memref<128x8xf32, #tpu.memory_space<vmem>>, %arg5: memref<8x8xf32, #tpu.memory_space<vmem>>) attributes {dimension_semantics = [#tpu.dimension_semantics<parallel>], iteration_bounds = array<i64: 1>, scalar_prefetch = 0 : i64, scratch_operands = 0 : i64, tpu.core_type = #tpu.core_type<tc>, window_params = [{transform_indices = @transform_0, window_bounds = array<i64: 8, 4>}, {pipeline_mode = #tpu.pipeline_mode<synchronous>, transform_indices = @transform_1, window_bounds = array<i64: 4, 128>}, {pipeline_mode = #tpu.pipeline_mode<synchronous>, transform_indices = @transform_2, window_bounds = array<i64: 1, 128>}, {pipeline_mode = #tpu.pipeline_mode<synchronous>, transform_indices = @transform_3, window_bounds = array<i64: 128, 8>}, {transform_indices = @transform_4, window_bounds = array<i64: 8, 8>}]} {
    %c0 = arith.constant 0 : index
    %c0_0 = arith.constant 0 : index
    %0 = vector.load %arg1[%c0, %c0_0] : memref<8x4xf32, #tpu.memory_space<vmem>>, vector<8x4xf32>
    %c0_1 = arith.constant 0 : index
    %c0_2 = arith.constant 0 : index
    %1 = vector.load %arg2[%c0_1, %c0_2] : memref<4x128xf32, #tpu.memory_space<vmem>>, vector<4x128xf32>
    %cst = arith.constant dense<0.000000e+00> : vector<8x128xf32>
    %2 = tpu.matmul %0, %1, %cst {dimension_numbers = #tpu.dot_dimension_numbers<[1], [0], [0], [1], [0, 0, 1, 1], [], []>} : vector<8x4xf32>, vector<4x128xf32>, vector<8x128xf32> -> vector<8x128xf32>
    %c0_3 = arith.constant 0 : index
    %c0_4 = arith.constant 0 : index
    %3 = vector.load %arg3[%c0_3, %c0_4] : memref<1x128xf32, #tpu.memory_space<vmem>>, vector<1x128xf32>
    %4 = vector.broadcast %3 : vector<1x128xf32> to vector<8x128xf32>
    %5 = arith.addf %2, %4 : vector<8x128xf32>
    %cst_5 = arith.constant 0.000000e+00 : f32
    %6 = vector.broadcast %cst_5 : f32 to vector<8x128xf32>
    %7 = arith.maximumf %5, %6 : vector<8x128xf32>
    %c0_6 = arith.constant 0 : index
    %c0_7 = arith.constant 0 : index
    %8 = vector.load %arg4[%c0_6, %c0_7] : memref<128x8xf32, #tpu.memory_space<vmem>>, vector<128x8xf32>
    %cst_8 = arith.constant dense<0.000000e+00> : vector<8x8xf32>
    %9 = tpu.matmul %7, %8, %cst_8 {dimension_numbers = #tpu.dot_dimension_numbers<[1], [0], [0], [1], [0, 0, 1, 1], [], []>} : vector<8x128xf32>, vector<128x8xf32>, vector<8x8xf32> -> vector<8x8xf32>
    %c0_9 = arith.constant 0 : index
    %c0_10 = arith.constant 0 : index
    %10 = vector.load %arg5[%c0_9, %c0_10] : memref<8x8xf32, #tpu.memory_space<vmem>>, vector<8x8xf32>
    tpu.vector_store %arg5[%c0_9, %c0_10], %9 {strides = array<i32>} : memref<8x8xf32, #tpu.memory_space<vmem>>, vector<8x8xf32>,
    return
  }
  func.func @transform_0(%arg0: i32) -> (i32, i32) {
    %c0_i32 = arith.constant 0 : i32
    %c0_i32_0 = arith.constant 0 : i32
    return %arg0, %c0_i32 : i32, i32
  }
  func.func @transform_1(%arg0: i32) -> (i32, i32) {
    %c0_i32 = arith.constant 0 : i32
    %c0_i32_0 = arith.constant 0 : i32
    %c0_i32_1 = arith.constant 0 : i32
    return %c0_i32, %c0_i32_0 : i32, i32
  }
  func.func @transform_2(%arg0: i32) -> (i32, i32) {
    %c0_i32 = arith.constant 0 : i32
    %c0_i32_0 = arith.constant 0 : i32
    %c0_i32_1 = arith.constant 0 : i32
    return %c0_i32, %c0_i32_0 : i32, i32
  }
  func.func @transform_3(%arg0: i32) -> (i32, i32) {
    %c0_i32 = arith.constant 0 : i32
    %c0_i32_0 = arith.constant 0 : i32
    %c0_i32_1 = arith.constant 0 : i32
    return %c0_i32, %c0_i32_0 : i32, i32
  }
  func.func @transform_4(%arg0: i32) -> (i32, i32) {
    %c0_i32 = arith.constant 0 : i32
    %c0_i32_0 = arith.constant 0 : i32
    return %arg0, %c0_i32 : i32, i32
  }
}

</mosaic_0001>

<llo_original>
// kernel: tpu_custom_call.1
$region0: #{tpu_custom_call.1}
  #allocation0 [shape = 'u32[]', space=smem, size = 0x4, offset = 0x4, fixed_abs, tag = 'smem constant byte address 0x4 - core index']
  #allocation1 [shape = 'u32[144,128]{1,0:T(1,128)}', space=vmem, size = 0x12000, scoped, tag = 'internal scratch']
  %s0 = inlined_call_operand.vmem [shape: f32[8,4], index: 0, kind: input, shape index: {}]
  %s1 = inlined_call_operand.vmem [shape: f32[4,128], index: 1, kind: input, shape index: {}]
  %s2 = inlined_call_operand.vmem [shape: f32[1,128], index: 2, kind: input, shape index: {}]
  %s3 = inlined_call_operand.vmem [shape: f32[128,8], index: 3, kind: input, shape index: {}]
  %s4 = inlined_call_operand.hbm [shape: f32[8,8], index: 4, kind: output, shape index: {}]
  %s5 = sld [smem:[#allocation0]]
  $region26: #{tpu_custom_call.1} parent=0
    _
  %s7 = ssub.s32 1, %s5
  %s8 = scalar_select 0, %s7, %s5
  $region1: #{tpu_custom_call.1} parent=0
    #allocation2 [shape = 'u8[4096]{0}', space=vmem, size = 0x1000, scoped, tag = 'output window, operand 0, single buffered']
    #allocation3 [shape = 's32[1]{0}', space=sflag, size = 0x4, scoped, tag = 'scoped memory for tpu_custom_call.1']
    %9 = vsyncpa [#allocation3], 0
    // Predicated region
    $region2: #{tpu_custom_call.1} parent=1 // pred_check
      _
    $region3: #{tpu_custom_call.1} parent=1 // pred_check_branch
      %11 = sbr.rel (0) target = $region5
    $region4: #{tpu_custom_call.1} parent=1 // pred_region
      _
    $region5: #{tpu_custom_call.1} parent=1 // pred_fallthru
      _
    // Predicated region
    $region6: #{tpu_custom_call.1} parent=1 // pred_check
      _
    $region7: #{tpu_custom_call.1} parent=1 // pred_check_branch
      %13 = sbr.rel (0) target = $region9
    $region8: #{tpu_custom_call.1} parent=1 // pred_region
      _
    $region9: #{tpu_custom_call.1} parent=1 // pred_fallthru
      _
    // Predicated region
    $region10: #{tpu_custom_call.1} parent=1 // pred_check
      _
    $region11: #{tpu_custom_call.1} parent=1 // pred_check_branch
      %15 = sbr.rel (0) target = $region13
    $region12: #{tpu_custom_call.1} parent=1 // pred_region
      _
    $region13: #{tpu_custom_call.1} parent=1 // pred_fallthru
      _
    // Predicated region
    $region14: #{tpu_custom_call.1} parent=1 // pred_check
      _
    $region15: #{tpu_custom_call.1} parent=1 // pred_check_branch
      %17 = sbr.rel (0) target = $region17
    $region16: #{tpu_custom_call.1} parent=1 // pred_region
      _
    $region17: #{tpu_custom_call.1} parent=1 // pred_fallthru
      _
    %v18 = vld [vmem:[%s0] sm:$0xff]
    %v19 = vld [vmem:[%s1] sm:$0xf]
    %v20 = vld [vmem:[%s2] sm:$0x1]
    %v22 = vlaneseq
    %v23 = vshrl.u32 %v22, 7
    %v24 = vsub.s32 0, %v23
    %v25 = vrot.slane %v20, %v24
    %vm27 = vcmask 31744
    %v29 = vsel %vm27, %v18, 0
    %vm31 = vcmask 1043456
    %v33 = vsel %vm31, %v19, 0
    %35 = vmatprep.subr.mxu0 0.0
    %36 = vmatpush1.msra.mxu0 0.0
    %37 = vmatprep.subr.mxu0 0.0
    %38 = vmatpush1.msra.mxu0 0.0
    %39 = vmatprep.subr.mxu0 0.0
    %40 = vmatpush1.msra.mxu0 0.0
    %41 = vmatprep.subr.mxu0 0.0
    %42 = vmatpush1.msra.mxu0 0.0
    %43 = vmatprep.subr.mxu0 0.0
    %44 = vmatpush1.msra.mxu0 0.0
    %45 = vmatprep.subr.mxu0 0.0
    %46 = vmatpush1.msra.mxu0 0.0
    %47 = vmatprep.subr.mxu0 0.0
    %48 = vmatpush1.msra.mxu0 0.0
    %49 = vmatprep.subr.mxu0 0.0
    %50 = vmatpush1.msra.mxu0 0.0
    %51 = vmatprep.subr.mxu0 0.0
    %52 = vmatpush1.msra.mxu0 0.0
    %53 = vmatprep.subr.mxu0 0.0
    %54 = vmatpush1.msra.mxu0 0.0
    %55 = vmatprep.subr.mxu0 0.0
    %56 = vmatpush1.msra.mxu0 0.0
    %57 = vmatprep.subr.mxu0 0.0
    %58 = vmatpush1.msra.mxu0 0.0
    %59 = vmatprep.subr.mxu0 0.0
    %60 = vmatpush1.msra.mxu0 0.0
    %61 = vmatprep.subr.mxu0 0.0
    %62 = vmatpush1.msra.mxu0 0.0
    %63 = vmatprep.subr.mxu0 0.0
    %64 = vmatpush1.msra.mxu0 0.0
    %65 = vmatprep.subr.mxu0 0.0
    %66 = vmatpush1.msra.mxu0 %v33
    %67 = vmatprep.subr.mxu0 0.0
    %68 = vmatpush2.msra.mxu0 0.0
    %69 = vmatprep.subr.mxu0 0.0
    %70 = vmatpush2.msra.mxu0 0.0
    %71 = vmatprep.subr.mxu0 0.0
    %72 = vmatpush2.msra.mxu0 0.0
    %73 = vmatprep.subr.mxu0 0.0
    %74 = vmatpush2.msra.mxu0 0.0
    %75 = vmatprep.subr.mxu0 0.0
    %76 = vmatpush2.msra.mxu0 0.0
    %77 = vmatprep.subr.mxu0 0.0
    %78 = vmatpush2.msra.mxu0 0.0
    %79 = vmatprep.subr.mxu0 0.0
    %80 = vmatpush2.msra.mxu0 0.0
    %81 = vmatprep.subr.mxu0 0.0
    %82 = vmatpush2.msra.mxu0 0.0
    %83 = vmatprep.subr.mxu0 0.0
    %84 = vmatpush2.msra.mxu0 0.0
    %85 = vmatprep.subr.mxu0 0.0
    %86 = vmatpush2.msra.mxu0 0.0
    %87 = vmatprep.subr.mxu0 0.0
    %88 = vmatpush2.msra.mxu0 0.0
    %89 = vmatprep.subr.mxu0 0.0
    %90 = vmatpush2.msra.mxu0 0.0
    %91 = vmatprep.subr.mxu0 0.0
    %92 = vmatpush2.msra.mxu0 0.0
    %93 = vmatprep.subr.mxu0 0.0
    %94 = vmatpush2.msra.mxu0 0.0
    %95 = vmatprep.subr.mxu0 0.0
    %96 = vmatpush2.msra.mxu0 0.0
    %97 = vmatprep.subr.mxu0 0.0
    %98 = vmatpush2.msra.mxu0 0.0
    %99 = vmatprep.mubr.f32.mxu0 0.0
    %100 = vmatmul.mubr.f32.gmra.mxu0 %v29
    %v101 = vpop.f32.mrf.mxu0
    %v102 = vadd.f32 %v25, %v101
    %v103 = vpop.f32.mrf.mxu0
    %104 = vdwg.mxu0
    %v105 = vmax.f32 %v102, 0.0
    %v106 = vld [vmem:[%s3] sm:$0xff]
    %v107 = vld [vmem:[%s3 + $0x8] sm:$0xff]
    %v108 = vld [vmem:[%s3 + $0x10] sm:$0xff]
    %v109 = vld [vmem:[%s3 + $0x18] sm:$0xff]
    %v110 = vld [vmem:[%s3 + $0x20] sm:$0xff]
    %v111 = vld [vmem:[%s3 + $0x28] sm:$0xff]
    %v112 = vld [vmem:[%s3 + $0x30] sm:$0xff]
    %v113 = vld [vmem:[%s3 + $0x38] sm:$0xff]
    %v114 = vld [vmem:[%s3 + $0x40] sm:$0xff]
    %v115 = vld [vmem:[%s3 + $0x48] sm:$0xff]
    %v116 = vld [vmem:[%s3 + $0x50] sm:$0xff]
    %v117 = vld [vmem:[%s3 + $0x58] sm:$0xff]
    %v118 = vld [vmem:[%s3 + $0x60] sm:$0xff]
    %v119 = vld [vmem:[%s3 + $0x68] sm:$0xff]
    %v120 = vld [vmem:[%s3 + $0x70] sm:$0xff]
    %v121 = vld [vmem:[%s3 + $0x78] sm:$0xff]
    %122 = vmatprep.subr.mxu0 0.0
    %123 = vmatpush1.msra.mxu0 %v121
    %124 = vmatprep.subr.mxu0 0.0
    %125 = vmatpush1.msra.mxu0 %v120
    %126 = vmatprep.subr.mxu0 0.0
    %127 = vmatpush1.msra.mxu0 %v119
    %128 = vmatprep.subr.mxu0 0.0
    %129 = vmatpush1.msra.mxu0 %v118
    %130 = vmatprep.subr.mxu0 0.0
    %131 = vmatpush1.msra.mxu0 %v117
    %132 = vmatprep.subr.mxu0 0.0
    %133 = vmatpush1.msra.mxu0 %v116
    %134 = vmatprep.subr.mxu0 0.0
    %135 = vmatpush1.msra.mxu0 %v115
    %136 = vmatprep.subr.mxu0 0.0
    %137 = vmatpush1.msra.mxu0 %v114
    %138 = vmatprep.subr.mxu0 0.0
    %139 = vmatpush1.msra.mxu0 %v113
    %140 = vmatprep.subr.mxu0 0.0
    %141 = vmatpush1.msra.mxu0 %v112
    %142 = vmatprep.subr.mxu0 0.0
    %143 = vmatpush1.msra.mxu0 %v111
    %144 = vmatprep.subr.mxu0 0.0
    %145 = vmatpush1.msra.mxu0 %v110
    %146 = vmatprep.subr.mxu0 0.0
    %147 = vmatpush1.msra.mxu0 %v109
    %148 = vmatprep.subr.mxu0 0.0
    %149 = vmatpush1.msra.mxu0 %v108
    %150 = vmatprep.subr.mxu0 0.0
    %151 = vmatpush1.msra.mxu0 %v107
    %152 = vmatprep.subr.mxu0 0.0
    %153 = vmatpush1.msra.mxu0 %v106
    %154 = vmatprep.subr.mxu0 0.0
    %155 = vmatpush2.msra.mxu0 0.0
    %156 = vmatprep.subr.mxu0 0.0
    %157 = vmatpush2.msra.mxu0 0.0
    %158 = vmatprep.subr.mxu0 0.0
    %159 = vmatpush2.msra.mxu0 0.0
    %160 = vmatprep.subr.mxu0 0.0
    %161 = vmatpush2.msra.mxu0 0.0
    %162 = vmatprep.subr.mxu0 0.0
    %163 = vmatpush2.msra.mxu0 0.0
    %164 = vmatprep.subr.mxu0 0.0
    %165 = vmatpush2.msra.mxu0 0.0
    %166 = vmatprep.subr.mxu0 0.0
    %167 = vmatpush2.msra.mxu0 0.0
    %168 = vmatprep.subr.mxu0 0.0
    %169 = vmatpush2.msra.mxu0 0.0
    %170 = vmatprep.subr.mxu0 0.0
    %171 = vmatpush2.msra.mxu0 0.0
    %172 = vmatprep.subr.mxu0 0.0
    %173 = vmatpush2.msra.mxu0 0.0
    %174 = vmatprep.subr.mxu0 0.0
    %175 = vmatpush2.msra.mxu0 0.0
    %176 = vmatprep.subr.mxu0 0.0
    %177 = vmatpush2.msra.mxu0 0.0
    %178 = vmatprep.subr.mxu0 0.0
    %179 = vmatpush2.msra.mxu0 0.0
    %180 = vmatprep.subr.mxu0 0.0
    %181 = vmatpush2.msra.mxu0 0.0
    %182 = vmatprep.subr.mxu0 0.0
    %183 = vmatpush2.msra.mxu0 0.0
    %184 = vmatprep.subr.mxu0 0.0
    %185 = vmatpush2.msra.mxu0 0.0
    %186 = vmatprep.mubr.f32.mxu0 0.0
    %187 = vmatmul.mubr.f32.gmra.mxu0 %v105
    %v188 = vpop.f32.mrf.mxu0
    %v189 = vadd.f32 0.0, %v188
    %v190 = vpop.f32.mrf.mxu0
    %191 = vdwg.mxu0
    %vm192 = vcmask 64512
    %193 = vst.msk [vmem:[#allocation2] sm:$0xff] %vm192, %v189
    // Predicated region
    $region18: #{tpu_custom_call.1} parent=1 // pred_check
      _
    $region19: #{tpu_custom_call.1} parent=1 // pred_check_branch
      %195 = sbr.rel (0) target = $region21
    $region20: #{tpu_custom_call.1} parent=1 // pred_region
      %s197 = ssub.s32 128, 128
      %198 = vsyncadd [#allocation3], %s197
      %s200 = sshll.u32 [#allocation2], 4
      %s201 = int_to_ptr.vmem [resolvable:$true] %s200
      %203 = dma.vmem_to_hbm [thread:$0]  %s201, 128, %s4, [#allocation3]
    $region21: #{tpu_custom_call.1} parent=1 // pred_fallthru
      _
    // Predicated region
    $region22: #{tpu_custom_call.1} parent=1 // pred_check
      _
    $region23: #{tpu_custom_call.1} parent=1 // pred_check_branch
      %205 = sbr.rel (0) target = $region25
    $region24: #{tpu_custom_call.1} parent=1 // pred_region
      %206 = dma.done [#allocation3], 128
    $region25: #{tpu_custom_call.1} parent=1 // pred_fallthru
      _
    %207 = vsyncpa [#allocation3], 1

</llo_original>
